<compile_context>
chip_gen: v7x
topology: tpu7x:2x2x1
jax: 0.10.0
libtpu: 0.0.40
codegen_flags: <defaults>
</compile_context>

<pallas_src>
import functools

import jax
import jax.numpy as jnp
from jax.experimental import pallas as pl
from jax.experimental.pallas import tpu as pltpu


_VMEM_BUDGET_BYTES = 48 << 20      # headroom under v7x's 64 MiB physical VMEM
_DEFAULT_SCOPED_VMEM = 32 << 20


def _mlp_fused_kernel(*refs, num_layers):
    """refs = (x_ref, w0_ref, b0_ref, w1_ref, b1_ref, ..., o_ref).

    x_ref: (tb, in_f) f32/bf16   w_i: (in_i, out_i) bf16   b_i: (1, out_i) f32
    o_ref: (tb, out_last) f32
    """
    x_ref = refs[0]
    o_ref = refs[-1]
    wb_refs = refs[1:-1]

    h = x_ref[...]                                 # activation stays on-chip
    for li in range(num_layers):                   # statically unrolled
        w = wb_refs[2 * li][...]                   # bf16
        b = wb_refs[2 * li + 1][...]               # f32, (1, out)
        y = jnp.dot(h.astype(jnp.bfloat16), w,
                    preferred_element_type=jnp.float32)   # MXU bf16xbf16 -> f32
        h = jnp.maximum(y + b, 0.0)                # f32 epilogue (v5e-safe)
    o_ref[...] = h.astype(o_ref.dtype)


def _round_up(n, m):
    return n + ((-n) % m)


def _estimate_vmem_bytes(tb, in_f, feat_dims, x_itemsize):
    """Rough per-grid-step VMEM estimate for the fused MLP kernel."""
    x_tiles = 2 * tb * in_f * x_itemsize                 # double-buffered input tile
    out_tiles = 2 * tb * feat_dims[-1] * 4               # double-buffered output tile
    weights = sum(di * do * 2 + do * 4                   # bf16 W + f32 b, single buffer
                  for di, do in zip(feat_dims[:-1], feat_dims[1:]))
    act = 3 * tb * max(feat_dims) * 4                    # f32 activation temporaries
    return x_tiles + out_tiles + weights + act


def _choose_batch_tile(B, in_f, feat_dims, x_itemsize):
    """Single tile for small B; otherwise 512-1024-row tiles capped so the grid
    has >= 2 steps (v7x megacore) and the per-step VMEM estimate fits budget."""
    if B <= 512:
        tb = B
    else:
        tb = min(1024, _round_up(pl.cdiv(B, 2), 8))      # >= 2 grid steps
        while tb > 256 and _estimate_vmem_bytes(tb, in_f, feat_dims,
                                                x_itemsize) > _VMEM_BUDGET_BYTES:
            tb = max(8, _round_up(tb // 2, 8))
    est = _estimate_vmem_bytes(tb, in_f, feat_dims, x_itemsize)
    if est > _VMEM_BUDGET_BYTES:
        # TODO(synk): fallback for very large hidden dims — tile each layer matmul
        # over output features (extra "arbitrary" grid axis + f32 accumulator
        # scratch) instead of keeping every full weight VMEM-resident.
        raise NotImplementedError(
            f"BodyNetwork weights too large for the VMEM-resident kernel "
            f"(~{est / (1 << 20):.1f} MiB estimated, budget "
            f"{_VMEM_BUDGET_BYTES / (1 << 20):.0f} MiB).")
    return tb, est


def _const_block_spec(shape):
    """Grid-invariant block (always block (0,0)); request single buffering so it
    isn't needlessly double-buffered.  Falls back cleanly on older jax."""
    idx_map = lambda i: (0, 0)
    try:
        return pl.BlockSpec(shape, idx_map, pipeline_mode=pl.Buffered(buffer_count=1))
    except Exception:  # pipeline_mode / Buffered not available
        return pl.BlockSpec(shape, idx_map)


def prepare_body_network_params(params):
    """One-time parameter preparation (keep OUT of the per-call jitted path):
      * weights stored (in, out) and cast to bf16 (halves weight HBM traffic),
      * biases reshaped to (1, out) f32,
      * hidden/output feature dims zero-padded to multiples of 128 so every
        inter-layer tensor and the output stores stay lane-dense.
    Returns (prepared_layers, out_features); out_features is the true width."""
    prepped = []
    prev_out_pad = 0
    out_features = params[-1][0].shape[1]
    for (w, b) in params:
        _, dout = w.shape
        out_pad = (-dout) % 128
        if prev_out_pad:
            w = jnp.pad(w, ((0, prev_out_pad), (0, 0)))
        if out_pad:
            w = jnp.pad(w, ((0, 0), (0, out_pad)))
            b = jnp.pad(b, (0, out_pad))
        prepped.append((w.astype(jnp.bfloat16),
                        b.reshape(1, -1).astype(jnp.float32)))
        prev_out_pad = out_pad
    return prepped, out_features


def body_network_forward(x, prepared_layers, *, out_features=None):
    """Fused forward pass of BodyNetwork: all Linear+ReLU layers in one pallas_call.

    x: (B, input_dim) f32 (bf16 also accepted directly, no wrapper cast added)
    prepared_layers: output of prepare_body_network_params
    returns (B, out_features) f32
    """
    B, in_f = x.shape
    num_layers = len(prepared_layers)
    feat_dims = [in_f] + [w.shape[1] for w, _ in prepared_layers]
    out_last = feat_dims[-1]
    if out_features is None:
        out_features = out_last

    tb, est_vmem = _choose_batch_tile(B, in_f, feat_dims, x.dtype.itemsize)
    grid = (pl.cdiv(B, tb),)    # ragged last block: OOB reads padded, writes dropped

    # Flat inputs + specs: x, then (w, b) per layer (already bf16 / (1,out) f32).
    flat_inputs = [x]
    in_specs = [pl.BlockSpec((tb, in_f), lambda i: (i, 0))]
    flops = 0
    bytes_accessed = x.size * x.dtype.itemsize + B * out_last * 4
    for w, b in prepared_layers:
        wi, wo = w.shape
        flat_inputs += [w, b]
        in_specs += [_const_block_spec((wi, wo)), _const_block_spec((1, wo))]
        flops += 2 * B * wi * wo
        bytes_accessed += w.size * w.dtype.itemsize + b.size * 4

    vmem_limit_bytes = None
    if tb >= 1024 or est_vmem > _DEFAULT_SCOPED_VMEM:
        vmem_limit_bytes = int(min(56 << 20,
                                   max(est_vmem + (4 << 20), _DEFAULT_SCOPED_VMEM)))

    kernel = functools.partial(_mlp_fused_kernel, num_layers=num_layers)

    out = pl.pallas_call(
        kernel,
        out_shape=jax.ShapeDtypeStruct((B, out_last), jnp.float32),
        grid_spec=pltpu.PrefetchScalarGridSpec(
            num_scalar_prefetch=0,
            grid=grid,
            in_specs=in_specs,
            out_specs=pl.BlockSpec((tb, out_last), lambda i: (i, 0)),
        ),
        compiler_params=pltpu.CompilerParams(
            dimension_semantics=("parallel",),
            vmem_limit_bytes=vmem_limit_bytes,
        ),
        cost_estimate=pl.CostEstimate(
            flops=flops, transcendentals=0, bytes_accessed=bytes_accessed),
    )(*flat_inputs)

    if out_features != out_last:
        out = out[:, :out_features]
    return out


def init_body_network_params(key, input_dim, hidden_layers=2, hidden_units=128):
    """Deterministic init mimicking nn.Linear default (uniform +/- 1/sqrt(fan_in))."""
    params = []
    dims = [input_dim] + [hidden_units] * hidden_layers
    for li in range(hidden_layers):
        fan_in, fan_out = dims[li], dims[li + 1]
        key, kw, kb = jax.random.split(key, 3)
        bound = 1.0 / jnp.sqrt(jnp.float32(fan_in))
        # stored as (in, out) — transposed relative to torch's (out, in)
        w = jax.random.uniform(kw, (fan_in, fan_out), jnp.float32, -bound, bound)
        b = jax.random.uniform(kb, (fan_out,), jnp.float32, -bound, bound)
        params.append((w, b))
    return params


def _reference_forward_bf16(x, params):
    """Pure-JAX reference emulating the kernel's bf16-operand / f32-accum matmul."""
    h = x
    for w, b in params:
        h_bf = h.astype(jnp.bfloat16).astype(jnp.float32)
        w_bf = w.astype(jnp.bfloat16).astype(jnp.float32)
        h = jnp.maximum(h_bf @ w_bf + b, 0.0)
    return h


def _reference_forward_f32(x, params):
    """Full-f32 reference matching the PyTorch module exactly."""
    h = x
    for w, b in params:
        h = jnp.maximum(h @ w + b, 0.0)
    return h


if __name__ == "__main__":
    key = jax.random.PRNGKey(0)
    kx, kp, kx2 = jax.random.split(key, 3)

    batch = 8
    input_dim = 32
    hidden_layers = 2
    hidden_units = 128

    x = jax.random.normal(kx, (batch, input_dim), jnp.float32)
    params = init_body_network_params(kp, input_dim, hidden_layers, hidden_units)
    prepped, out_features = prepare_body_network_params(params)

    fwd = jax.jit(body_network_forward, static_argnames=("out_features",))

    # Small latency-bound case (single tile, K = input_dim, no wrapper pads).
    out = jax.block_until_ready(fwd(x, prepped, out_features=out_features))
    assert out.shape == (batch, hidden_units)
    assert bool(jnp.all(out >= 0.0))
    ref = _reference_forward_bf16(x, params)
    assert bool(jnp.allclose(out, ref, atol=1e-3, rtol=1e-3)), "small-batch mismatch vs bf16 ref"
    ref_f32 = _reference_forward_f32(x, params)
    assert bool(jnp.allclose(out, ref_f32, atol=5e-2, rtol=5e-2)), "small-batch drift vs f32 ref"

    # Larger odd batch: exercises the multi-step "parallel" grid and the ragged
    # last block (OOB rows dropped by Pallas, no wrapper-side batch padding).
    big_batch = 520
    x_big = jax.random.normal(kx2, (big_batch, input_dim), jnp.float32)
    out_big = jax.block_until_ready(fwd(x_big, prepped, out_features=out_features))
    assert out_big.shape == (big_batch, hidden_units)
    ref_big = _reference_forward_bf16(x_big, params)
    assert bool(jnp.allclose(out_big, ref_big, atol=1e-3, rtol=1e-3)), "big-batch mismatch"

    print("KERNEL_OK")
</pallas_src>

<mosaic_0001>
module attributes {stable_mosaic.version = 11 : i64} {
  func.func @_mlp_fused_kernel(%arg0: i32, %arg1: memref<8x32xf32, #tpu.memory_space<vmem>>, %arg2: memref<32x128xbf16, #tpu.memory_space<vmem>>, %arg3: memref<1x128xf32, #tpu.memory_space<vmem>>, %arg4: memref<128x128xbf16, #tpu.memory_space<vmem>>, %arg5: memref<1x128xf32, #tpu.memory_space<vmem>>, %arg6: memref<8x128xf32, #tpu.memory_space<vmem>>) attributes {dimension_semantics = [#tpu.dimension_semantics<parallel>], iteration_bounds = array<i64: 1>, scalar_prefetch = 0 : i64, scratch_operands = 0 : i64, tpu.core_type = #tpu.core_type<tc>, window_params = [{transform_indices = @transform_0, window_bounds = array<i64: 8, 32>}, {pipeline_mode = #tpu.pipeline_mode<synchronous>, transform_indices = @transform_1, window_bounds = array<i64: 32, 128>}, {pipeline_mode = #tpu.pipeline_mode<synchronous>, transform_indices = @transform_2, window_bounds = array<i64: 1, 128>}, {pipeline_mode = #tpu.pipeline_mode<synchronous>, transform_indices = @transform_3, window_bounds = array<i64: 128, 128>}, {pipeline_mode = #tpu.pipeline_mode<synchronous>, transform_indices = @transform_4, window_bounds = array<i64: 1, 128>}, {transform_indices = @transform_5, window_bounds = array<i64: 8, 128>}]} {
    %c0 = arith.constant 0 : index
    %c0_0 = arith.constant 0 : index
    %0 = vector.load %arg1[%c0, %c0_0] : memref<8x32xf32, #tpu.memory_space<vmem>>, vector<8x32xf32>
    %c0_1 = arith.constant 0 : index
    %c0_2 = arith.constant 0 : index
    %1 = vector.load %arg2[%c0_1, %c0_2] : memref<32x128xbf16, #tpu.memory_space<vmem>>, vector<32x128xbf16>
    %c0_3 = arith.constant 0 : index
    %c0_4 = arith.constant 0 : index
    %2 = vector.load %arg3[%c0_3, %c0_4] : memref<1x128xf32, #tpu.memory_space<vmem>>, vector<1x128xf32>
    %3 = arith.truncf %0 : vector<8x32xf32> to vector<8x32xbf16>
    %cst = arith.constant dense<0.000000e+00> : vector<8x128xf32>
    %4 = tpu.matmul %3, %1, %cst {dimension_numbers = #tpu.dot_dimension_numbers<[1], [0], [0], [1], [0, 0, 1, 1], [], []>} : vector<8x32xbf16>, vector<32x128xbf16>, vector<8x128xf32> -> vector<8x128xf32>
    %5 = vector.broadcast %2 : vector<1x128xf32> to vector<8x128xf32>
    %6 = arith.addf %4, %5 : vector<8x128xf32>
    %cst_5 = arith.constant 0.000000e+00 : f32
    %7 = vector.broadcast %cst_5 : f32 to vector<8x128xf32>
    %8 = arith.maximumf %6, %7 : vector<8x128xf32>
    %c0_6 = arith.constant 0 : index
    %c0_7 = arith.constant 0 : index
    %9 = vector.load %arg4[%c0_6, %c0_7] : memref<128x128xbf16, #tpu.memory_space<vmem>>, vector<128x128xbf16>
    %c0_8 = arith.constant 0 : index
    %c0_9 = arith.constant 0 : index
    %10 = vector.load %arg5[%c0_8, %c0_9] : memref<1x128xf32, #tpu.memory_space<vmem>>, vector<1x128xf32>
    %11 = arith.truncf %8 : vector<8x128xf32> to vector<8x128xbf16>
    %cst_10 = arith.constant dense<0.000000e+00> : vector<8x128xf32>
    %12 = tpu.matmul %11, %9, %cst_10 {dimension_numbers = #tpu.dot_dimension_numbers<[1], [0], [0], [1], [0, 0, 1, 1], [], []>} : vector<8x128xbf16>, vector<128x128xbf16>, vector<8x128xf32> -> vector<8x128xf32>
    %13 = vector.broadcast %10 : vector<1x128xf32> to vector<8x128xf32>
    %14 = arith.addf %12, %13 : vector<8x128xf32>
    %cst_11 = arith.constant 0.000000e+00 : f32
    %15 = vector.broadcast %cst_11 : f32 to vector<8x128xf32>
    %16 = arith.maximumf %14, %15 : vector<8x128xf32>
    %c0_12 = arith.constant 0 : index
    %c0_13 = arith.constant 0 : index
    %17 = vector.load %arg6[%c0_12, %c0_13] : memref<8x128xf32, #tpu.memory_space<vmem>>, vector<8x128xf32>
    tpu.vector_store %arg6[%c0_12, %c0_13], %16 {strides = array<i32>} : memref<8x128xf32, #tpu.memory_space<vmem>>, vector<8x128xf32>,
    return
  }
  func.func @transform_0(%arg0: i32) -> (i32, i32) {
    %c0_i32 = arith.constant 0 : i32
    %c0_i32_0 = arith.constant 0 : i32
    return %arg0, %c0_i32 : i32, i32
  }
  func.func @transform_1(%arg0: i32) -> (i32, i32) {
    %c0_i32 = arith.constant 0 : i32
    %c0_i32_0 = arith.constant 0 : i32
    %c0_i32_1 = arith.constant 0 : i32
    return %c0_i32, %c0_i32_0 : i32, i32
  }
  func.func @transform_2(%arg0: i32) -> (i32, i32) {
    %c0_i32 = arith.constant 0 : i32
    %c0_i32_0 = arith.constant 0 : i32
    %c0_i32_1 = arith.constant 0 : i32
    return %c0_i32, %c0_i32_0 : i32, i32
  }
  func.func @transform_3(%arg0: i32) -> (i32, i32) {
    %c0_i32 = arith.constant 0 : i32
    %c0_i32_0 = arith.constant 0 : i32
    %c0_i32_1 = arith.constant 0 : i32
    return %c0_i32, %c0_i32_0 : i32, i32
  }
  func.func @transform_4(%arg0: i32) -> (i32, i32) {
    %c0_i32 = arith.constant 0 : i32
    %c0_i32_0 = arith.constant 0 : i32
    %c0_i32_1 = arith.constant 0 : i32
    return %c0_i32, %c0_i32_0 : i32, i32
  }
  func.func @transform_5(%arg0: i32) -> (i32, i32) {
    %c0_i32 = arith.constant 0 : i32
    %c0_i32_0 = arith.constant 0 : i32
    return %arg0, %c0_i32 : i32, i32
  }
}

</mosaic_0001>

<llo_original>
// kernel: body_network_forward.1
$region0: #{body_network_forward.1}
  #allocation0 [shape = 'u32[]', space=smem, size = 0x4, offset = 0x4, fixed_abs, tag = 'smem constant byte address 0x4 - core index']
  #allocation1 [shape = 'u32[144,128]{1,0:T(1,128)}', space=vmem, size = 0x12000, scoped, tag = 'internal scratch']
  %s0 = inlined_call_operand.hbm [shape: f32[8,32], index: 0, kind: input, shape index: {}]
  %s1 = inlined_call_operand.hbm [shape: bf16[32,128], index: 1, kind: input, shape index: {}]
  %s2 = inlined_call_operand.vmem [shape: f32[1,128], index: 2, kind: input, shape index: {}]
  %s3 = inlined_call_operand.hbm [shape: bf16[128,128], index: 3, kind: input, shape index: {}]
  %s4 = inlined_call_operand.vmem [shape: f32[1,128], index: 4, kind: input, shape index: {}]
  %s5 = inlined_call_operand.hbm [shape: f32[8,128], index: 5, kind: output, shape index: {}]
  %s6 = sld [smem:[#allocation0]]
  $region42: #{body_network_forward.1} parent=0
    _
  %s8 = ssub.s32 1, %s6
  %s9 = scalar_select 0, %s8, %s6
  $region1: #{body_network_forward.1} parent=0
    #allocation2 [shape = 'u8[4096]{0}', space=vmem, size = 0x1000, scoped, tag = 'input window, operand 0, single buffered']
    #allocation3 [shape = 's32[1]{0}', space=sflag, size = 0x4, scoped, tag = 'scoped memory for body_network_forward.1']
    #allocation4 [shape = 's32[1]{0}', space=sflag, size = 0x4, scoped, tag = 'scoped memory for body_network_forward.1']
    #allocation5 [shape = 'u8[8192]{0}', space=vmem, size = 0x2000, scoped, tag = 'input window, operand 1, single buffered']
    #allocation6 [shape = 's32[1]{0}', space=sflag, size = 0x4, scoped, tag = 'scoped memory for body_network_forward.1']
    #allocation7 [shape = 'u8[32768]{0}', space=vmem, size = 0x8000, scoped, tag = 'input window, operand 3, single buffered']
    #allocation8 [shape = 'u8[4096]{0}', space=vmem, size = 0x1000, scoped, tag = 'output window, operand 0, single buffered']
    %10 = vsyncpa [#allocation3], 0
    %11 = vsyncpa [#allocation6], 0
    %12 = vsyncpa [#allocation4], 0
    // Predicated region
    $region2: #{body_network_forward.1} parent=1 // pred_check
      _
    $region3: #{body_network_forward.1} parent=1 // pred_check_branch
      %14 = sbr.rel (0) target = $region5
    $region4: #{body_network_forward.1} parent=1 // pred_region
      %s16 = ssub.s32 128, 128
      %17 = vsyncadd [#allocation3], %s16
      %s19 = sshll.u32 [#allocation2], 4
      %s20 = int_to_ptr.vmem [resolvable:$true] %s19
      %22 = dma.hbm_to_vmem [thread:$0]  %s0, 128, %s20, [#allocation3]
    $region5: #{body_network_forward.1} parent=1 // pred_fallthru
      _
    // Predicated region
    $region6: #{body_network_forward.1} parent=1 // pred_check
      _
    $region7: #{body_network_forward.1} parent=1 // pred_check_branch
      %24 = sbr.rel (0) target = $region9
    $region8: #{body_network_forward.1} parent=1 // pred_region
      %s26 = ssub.s32 256, 256
      %27 = vsyncadd [#allocation6], %s26
      %s28 = sshll.u32 [#allocation5], 4
      %s29 = int_to_ptr.vmem [resolvable:$true] %s28
      %34 = dma.hbm_to_vmem [thread:$0]  %s1, 256, %s29, [#allocation6], 64, 64, 4
    $region9: #{body_network_forward.1} parent=1 // pred_fallthru
      _
    // Predicated region
    $region10: #{body_network_forward.1} parent=1 // pred_check
      _
    $region11: #{body_network_forward.1} parent=1 // pred_check_branch
      %36 = sbr.rel (0) target = $region13
    $region12: #{body_network_forward.1} parent=1 // pred_region
      _
    $region13: #{body_network_forward.1} parent=1 // pred_fallthru
      _
    // Predicated region
    $region14: #{body_network_forward.1} parent=1 // pred_check
      _
    $region15: #{body_network_forward.1} parent=1 // pred_check_branch
      %38 = sbr.rel (0) target = $region17
    $region16: #{body_network_forward.1} parent=1 // pred_region
      %s40 = ssub.s32 1024, 1024
      %41 = vsyncadd [#allocation6], %s40
      %s42 = sshll.u32 [#allocation7], 4
      %s43 = int_to_ptr.vmem [resolvable:$true] %s42
      %48 = dma.hbm_to_vmem [thread:$0]  %s3, 1024, %s43, [#allocation6], 64, 64, 4
    $region17: #{body_network_forward.1} parent=1 // pred_fallthru
      _
    // Predicated region
    $region18: #{body_network_forward.1} parent=1 // pred_check
      _
    $region19: #{body_network_forward.1} parent=1 // pred_check_branch
      %50 = sbr.rel (0) target = $region21
    $region20: #{body_network_forward.1} parent=1 // pred_region
      _
    $region21: #{body_network_forward.1} parent=1 // pred_fallthru
      _
    // Predicated region
    $region22: #{body_network_forward.1} parent=1 // pred_check
      _
    $region23: #{body_network_forward.1} parent=1 // pred_check_branch
      %52 = sbr.rel (0) target = $region25
    $region24: #{body_network_forward.1} parent=1 // pred_region
      %53 = dma.done [#allocation3], 128
    $region25: #{body_network_forward.1} parent=1 // pred_fallthru
      _
    // Predicated region
    $region26: #{body_network_forward.1} parent=1 // pred_check
      _
    $region27: #{body_network_forward.1} parent=1 // pred_check_branch
      %55 = sbr.rel (0) target = $region29
    $region28: #{body_network_forward.1} parent=1 // pred_region
      %56 = dma.done [#allocation6], 256
    $region29: #{body_network_forward.1} parent=1 // pred_fallthru
      _
    // Predicated region
    $region30: #{body_network_forward.1} parent=1 // pred_check
      _
    $region31: #{body_network_forward.1} parent=1 // pred_check_branch
      %58 = sbr.rel (0) target = $region33
    $region32: #{body_network_forward.1} parent=1 // pred_region
      %59 = dma.done [#allocation6], 1024
    $region33: #{body_network_forward.1} parent=1 // pred_fallthru
      _
    %v61 = vld [vmem:[#allocation2] sm:$0xff]
    %v62 = vld [vmem:[#allocation5] sm:$0xf]
    %v63 = vld [vmem:[#allocation5 + $0x4] sm:$0xf]
    %v64 = vld [vmem:[#allocation5 + $0x8] sm:$0xf]
    %v65 = vld [vmem:[#allocation5 + $0xc] sm:$0xf]
    %v66 = vld [vmem:[%s2] sm:$0x1]
    %v67 = vpack.c.bf16 %v61, %v61
    %v69 = vlaneseq
    %v70 = vshrl.u32 %v69, 7
    %v71 = vsub.s32 0, %v70
    %v72 = vrot.slane %v66, %v71
    %v78 = vunpack.c.l.b16 %v62
    %v79 = vunpack.c.l.b16 %v63
    %v80 = vunpack.c.l.b16 %v64
    %v81 = vunpack.c.l.b16 %v65
    %v82 = vpack.c.b16 %v79, %v78
    %v83 = vpack.c.b16 %v81, %v80
    %vm86 = vcmask 261120
    %v88 = vsel %vm86, %v67, 0
    %90 = vmatprep.subr.bf16.mxu0 0
    %91 = vmatpush1.bf16.msra.mxu0 %v82
    %92 = vmatprep.subr.bf16.mxu0 0
    %93 = vmatpush1.bf16.msra.mxu0 %v83
    %94 = vmatprep.subr.bf16.mxu0 0
    %95 = vmatpush1.bf16.msra.mxu0 0
    %96 = vmatprep.subr.bf16.mxu0 0
    %97 = vmatpush1.bf16.msra.mxu0 0
    %98 = vmatprep.subr.bf16.mxu0 0
    %99 = vmatpush1.bf16.msra.mxu0 0
    %100 = vmatprep.subr.bf16.mxu0 0
    %101 = vmatpush1.bf16.msra.mxu0 0
    %102 = vmatprep.subr.bf16.mxu0 0
    %103 = vmatpush1.bf16.msra.mxu0 0
    %104 = vmatprep.subr.bf16.mxu0 0
    %105 = vmatpush1.bf16.msra.mxu0 0
    %106 = vmatprep.subr.bf16.mxu0 0
    %107 = vmatpush1.bf16.msra.mxu0 0
    %108 = vmatprep.subr.bf16.mxu0 0
    %109 = vmatpush1.bf16.msra.mxu0 0
    %110 = vmatprep.subr.bf16.mxu0 0
    %111 = vmatpush1.bf16.msra.mxu0 0
    %112 = vmatprep.subr.bf16.mxu0 0
    %113 = vmatpush1.bf16.msra.mxu0 0
    %114 = vmatprep.subr.bf16.mxu0 0
    %115 = vmatpush1.bf16.msra.mxu0 0
    %116 = vmatprep.subr.bf16.mxu0 0
    %117 = vmatpush1.bf16.msra.mxu0 0
    %118 = vmatprep.subr.bf16.mxu0 0
    %119 = vmatpush1.bf16.msra.mxu0 0
    %120 = vmatprep.subr.bf16.mxu0 0
    %121 = vmatpush1.bf16.msra.mxu0 0
    %122 = vmatprep.mubr.bf16.mxu0 0
    %123 = vmatmul.mubr.bf16.gmra.mrb[0].mxu0 %v88
    %v124 = vpop.f32.mrb[0].mxu0
    %v125 = vadd.f32 %v72, %v124
    %v126 = vpop.f32.mrb[0].mxu0
    %v127 = vpop.f32.mrb[0].mxu0
    %v128 = vpop.f32.mrb[0].mxu0
    %129 = vdwg.mxu0
    %v130 = vmax.f32 %v125, 0.0
    %v131 = vld [vmem:[#allocation7] sm:$0xf]
    %v132 = vld [vmem:[#allocation7 + $0x4] sm:$0xf]
    %v133 = vld [vmem:[#allocation7 + $0x8] sm:$0xf]
    %v134 = vld [vmem:[#allocation7 + $0xc] sm:$0xf]
    %v135 = vld [vmem:[#allocation7 + $0x10] sm:$0xf]
    %v136 = vld [vmem:[#allocation7 + $0x14] sm:$0xf]
    %v137 = vld [vmem:[#allocation7 + $0x18] sm:$0xf]
    %v138 = vld [vmem:[#allocation7 + $0x1c] sm:$0xf]
    %v139 = vld [vmem:[#allocation7 + $0x20] sm:$0xf]
    %v140 = vld [vmem:[#allocation7 + $0x24] sm:$0xf]
    %v141 = vld [vmem:[#allocation7 + $0x28] sm:$0xf]
    %v142 = vld [vmem:[#allocation7 + $0x2c] sm:$0xf]
    %v143 = vld [vmem:[#allocation7 + $0x30] sm:$0xf]
    %v144 = vld [vmem:[#allocation7 + $0x34] sm:$0xf]
    %v145 = vld [vmem:[#allocation7 + $0x38] sm:$0xf]
    %v146 = vld [vmem:[#allocation7 + $0x3c] sm:$0xf]
    %v147 = vld [vmem:[%s4] sm:$0x1]
    %v148 = vpack.c.bf16 %v130, %v130
    %v150 = vlaneseq
    %v151 = vshrl.u32 %v150, 7
    %v152 = vsub.s32 0, %v151
    %v153 = vrot.slane %v147, %v152
    %v171 = vunpack.c.l.b16 %v131
    %v172 = vunpack.c.l.b16 %v132
    %v173 = vunpack.c.l.b16 %v133
    %v174 = vunpack.c.l.b16 %v134
    %v175 = vunpack.c.l.b16 %v135
    %v176 = vunpack.c.l.b16 %v136
    %v177 = vunpack.c.l.b16 %v137
    %v178 = vunpack.c.l.b16 %v138
    %v179 = vunpack.c.l.b16 %v139
    %v180 = vunpack.c.l.b16 %v140
    %v181 = vunpack.c.l.b16 %v141
    %v182 = vunpack.c.l.b16 %v142
    %v183 = vunpack.c.l.b16 %v143
    %v184 = vunpack.c.l.b16 %v144
    %v185 = vunpack.c.l.b16 %v145
    %v186 = vunpack.c.l.b16 %v146
    %v187 = vpack.c.b16 %v172, %v171
    %v188 = vpack.c.b16 %v174, %v173
    %v189 = vpack.c.b16 %v176, %v175
    %v190 = vpack.c.b16 %v178, %v177
    %v191 = vpack.c.b16 %v180, %v179
    %v192 = vpack.c.b16 %v182, %v181
    %v193 = vpack.c.b16 %v184, %v183
    %v194 = vpack.c.b16 %v186, %v185
    %203 = vmatprep.subr.bf16.mxu0 0
    %204 = vmatpush1.bf16.msra.mxu0 %v187
    %205 = vmatprep.subr.bf16.mxu0 0
    %206 = vmatpush1.bf16.msra.mxu0 %v188
    %207 = vmatprep.subr.bf16.mxu0 0
    %208 = vmatpush1.bf16.msra.mxu0 %v189
    %209 = vmatprep.subr.bf16.mxu0 0
    %210 = vmatpush1.bf16.msra.mxu0 %v190
    %211 = vmatprep.subr.bf16.mxu0 0
    %212 = vmatpush1.bf16.msra.mxu0 %v191
    %213 = vmatprep.subr.bf16.mxu0 0
    %214 = vmatpush1.bf16.msra.mxu0 %v192
    %215 = vmatprep.subr.bf16.mxu0 0
    %216 = vmatpush1.bf16.msra.mxu0 %v193
    %217 = vmatprep.subr.bf16.mxu0 0
    %218 = vmatpush1.bf16.msra.mxu0 %v194
    %219 = vmatprep.subr.bf16.mxu0 0
    %220 = vmatpush1.bf16.msra.mxu0 0
    %221 = vmatprep.subr.bf16.mxu0 0
    %222 = vmatpush1.bf16.msra.mxu0 0
    %223 = vmatprep.subr.bf16.mxu0 0
    %224 = vmatpush1.bf16.msra.mxu0 0
    %225 = vmatprep.subr.bf16.mxu0 0
    %226 = vmatpush1.bf16.msra.mxu0 0
    %227 = vmatprep.subr.bf16.mxu0 0
    %228 = vmatpush1.bf16.msra.mxu0 0
    %229 = vmatprep.subr.bf16.mxu0 0
    %230 = vmatpush1.bf16.msra.mxu0 0
    %231 = vmatprep.subr.bf16.mxu0 0
    %232 = vmatpush1.bf16.msra.mxu0 0
    %233 = vmatprep.subr.bf16.mxu0 0
    %234 = vmatpush1.bf16.msra.mxu0 0
    %235 = vmatprep.mubr.bf16.mxu0 0
    %236 = vmatmul.mubr.bf16.gmra.mrb[0].mxu0 %v148
    %v237 = vpop.f32.mrb[0].mxu0
    %v238 = vadd.f32 %v153, %v237
    %v239 = vpop.f32.mrb[0].mxu0
    %v240 = vpop.f32.mrb[0].mxu0
    %v241 = vpop.f32.mrb[0].mxu0
    %242 = vdwg.mxu0
    %v243 = vmax.f32 %v238, 0.0
    %244 = vst [vmem:[#allocation8] sm:$0xff] %v243
    // Predicated region
    $region34: #{body_network_forward.1} parent=1 // pred_check
      _
    $region35: #{body_network_forward.1} parent=1 // pred_check_branch
      %246 = sbr.rel (0) target = $region37
    $region36: #{body_network_forward.1} parent=1 // pred_region
      %s248 = ssub.s32 128, 128
      %249 = vsyncadd [#allocation4], %s248
      %s251 = sshll.u32 [#allocation8], 4
      %s252 = int_to_ptr.vmem [resolvable:$true] %s251
      %254 = dma.vmem_to_hbm [thread:$0]  %s252, 128, %s5, [#allocation4]
    $region37: #{body_network_forward.1} parent=1 // pred_fallthru
      _
    // Predicated region
    $region38: #{body_network_forward.1} parent=1 // pred_check
      _
    $region39: #{body_network_forward.1} parent=1 // pred_check_branch
      %256 = sbr.rel (0) target = $region41
    $region40: #{body_network_forward.1} parent=1 // pred_region
      %257 = dma.done [#allocation4], 128
    $region41: #{body_network_forward.1} parent=1 // pred_fallthru
      _
    %258 = vsyncpa [#allocation3], 1
    %259 = vsyncpa [#allocation6], 1
    %260 = vsyncpa [#allocation4], 1

</llo_original>
